<compile_context>
chip_gen: v7x
topology: tpu7x:2x2x1
jax: 0.10.0
libtpu: 0.0.40
codegen_flags: <defaults>
</compile_context>

<pallas_src>
import jax
import jax.numpy as jnp
from jax.experimental import pallas as pl
from jax.experimental.pallas import tpu as pltpu


def _meanshift_kernel(w_ref, b_ref, x_ref, o_ref):
    # w_ref: (3, 3) f32 in SMEM; b_ref: (3,) f32 in SMEM.
    # x_ref / o_ref: (3, row_tile, col_tile) VMEM blocks (batch dim squeezed);
    # each channel slab x_ref[c] is a dense 2D tile of full vregs.
    x0 = x_ref[0]
    x1 = x_ref[1]
    x2 = x_ref[2]
    # Statically unrolled 1x1 conv: per output channel, 3 scalar*tile FMAs
    # (math in f32 via the f32 SMEM scalars) + bias, cast only on store.
    for c in range(3):
        o_ref[c] = (
            w_ref[c, 0] * x0 + w_ref[c, 1] * x1 + w_ref[c, 2] * x2 + b_ref[c]
        ).astype(o_ref.dtype)


def mean_shift(x_nchw, weight, bias, *, max_row_tile=4096, max_col_tile=16384):
    """1x1 conv over NCHW input: weight (3, 3), bias (3,). Matches MeanShift."""
    n, c, h, w = x_nchw.shape
    assert c == 3 and weight.shape == (3, 3) and bias.shape == (3,)
    hw = h * w
    itemsize = jnp.dtype(x_nchw.dtype).itemsize

    if hw % 128 == 0:
        # Dense layout: (rows, 128) per channel.
        cols = 128
        rows = hw // 128
        col_tile = cols
        if rows <= 8:
            row_tile = rows                       # full extent (small inputs)
        else:
            tile = max_row_tile
            if n == 1:
                # Ensure >= 2 grid steps so both v7x TensorCores get work.
                tile = min(tile, pl.cdiv(rows, 2))
            # Multiple of 8 (or full extent) to satisfy the (8, 128) rule.
            row_tile = min(rows, max(8, (tile // 8) * 8))
    else:
        # Fallback for odd spatial sizes: one sublane row per channel.
        # TODO(synk): pad H*W up to a multiple of 128 for full sublane density.
        rows, cols = 1, hw
        row_tile = 1
        col_tile = hw if hw <= max_col_tile else max_col_tile  # mult. of 128

    x4d = x_nchw.reshape(n, 3, rows, cols)        # metadata-only, native NCHW
    grid = (n, pl.cdiv(rows, row_tile), pl.cdiv(cols, col_tile))

    cost = pl.CostEstimate(
        flops=21 * n * hw,                        # ~7 flops/elem * 3 out chans
        bytes_accessed=2 * n * 3 * hw * itemsize,  # 1 read + 1 write
        transcendentals=0,
    )

    out4d = pl.pallas_call(
        _meanshift_kernel,
        out_shape=jax.ShapeDtypeStruct((n, 3, rows, cols), x_nchw.dtype),
        grid=grid,
        in_specs=[
            pl.BlockSpec(memory_space=pltpu.MemorySpace.SMEM),   # weight (3,3)
            pl.BlockSpec(memory_space=pltpu.MemorySpace.SMEM),   # bias   (3,)
            pl.BlockSpec((None, 3, row_tile, col_tile),
                         lambda i, j, k: (i, 0, j, k)),          # x tile
        ],
        out_specs=pl.BlockSpec((None, 3, row_tile, col_tile),
                               lambda i, j, k: (i, 0, j, k)),
        compiler_params=pltpu.CompilerParams(
            dimension_semantics=("parallel", "parallel", "parallel"),
            vmem_limit_bytes=48 * 1024 * 1024,
        ),
        cost_estimate=cost,
    )(weight.astype(jnp.float32), bias.astype(jnp.float32), x4d)

    return out4d.reshape(n, 3, h, w)


def make_meanshift_params(mean_rgb, sub):
    """Deterministic parameter setup mirroring MeanShift.__init__."""
    sign = -1.0 if sub else 1.0
    weight = jnp.eye(3, dtype=jnp.float32)        # (3,3,1,1) 1x1 conv -> (3,3)
    bias = jnp.asarray(
        [mean_rgb[0] * sign, mean_rgb[1] * sign, mean_rgb[2] * sign],
        dtype=jnp.float32,
    )
    return weight, bias


if __name__ == "__main__":
    key = jax.random.PRNGKey(0)
    # NCHW input; channels must be 3 for MeanShift.
    x = jax.random.normal(key, (2, 3, 16, 16), dtype=jnp.float32)

    mean_rgb = (0.4488, 0.4371, 0.4040)
    weight, bias = make_meanshift_params(mean_rgb, sub=True)

    out = jax.block_until_ready(mean_shift(x, weight, bias))
    ref = jnp.einsum("oc,nchw->nohw", weight, x) + bias[None, :, None, None]
    assert out.shape == x.shape
    assert jnp.allclose(out, ref, atol=1e-5), "mismatch vs MeanShift reference"

    # General (non-diagonal) 1x1-conv path of the kernel.
    w_rand = jax.random.normal(jax.random.PRNGKey(1), (3, 3), dtype=jnp.float32)
    b_rand = jax.random.normal(jax.random.PRNGKey(2), (3,), dtype=jnp.float32)
    out2 = jax.block_until_ready(mean_shift(x, w_rand, b_rand))
    ref2 = jnp.einsum("oc,nchw->nohw", w_rand, x) + b_rand[None, :, None, None]
    assert jnp.allclose(out2, ref2, atol=1e-5), "mismatch vs general conv ref"

    # Fallback path: H*W not divisible by 128 (odd spatial size), N == 1.
    x_odd = jax.random.normal(jax.random.PRNGKey(3), (1, 3, 7, 9),
                              dtype=jnp.float32)
    out3 = jax.block_until_ready(mean_shift(x_odd, weight, bias))
    ref3 = jnp.einsum("oc,nchw->nohw", weight, x_odd) + bias[None, :, None, None]
    assert jnp.allclose(out3, ref3, atol=1e-5), "mismatch on odd-size fallback"

    # bf16 I/O (math stays f32 via the SMEM weights, cast on store).
    x_bf = x.astype(jnp.bfloat16)
    out4 = jax.block_until_ready(mean_shift(x_bf, weight, bias))
    ref4 = (jnp.einsum("oc,nchw->nohw", weight, x_bf.astype(jnp.float32))
            + bias[None, :, None, None])
    assert out4.dtype == jnp.bfloat16
    assert jnp.allclose(out4.astype(jnp.float32), ref4, atol=3e-2), "bf16 path"

    print("KERNEL_OK")
</pallas_src>

<mosaic_0001>
module attributes {stable_mosaic.version = 11 : i64} {
  func.func @_meanshift_kernel(%arg0: i32, %arg1: i32, %arg2: i32, %arg3: memref<3x3xf32, #tpu.memory_space<smem>>, %arg4: memref<3xf32, #tpu.memory_space<smem>>, %arg5: memref<1x3x2x128xf32, #tpu.memory_space<vmem>>, %arg6: memref<1x3x2x128xf32, #tpu.memory_space<vmem>>) attributes {dimension_semantics = [#tpu.dimension_semantics<parallel>, #tpu.dimension_semantics<parallel>, #tpu.dimension_semantics<parallel>], iteration_bounds = array<i64: 2, 1, 1>, scalar_prefetch = 0 : i64, scratch_operands = 0 : i64, tpu.core_type = #tpu.core_type<tc>, window_params = [{transform_indices = @transform_0, window_bounds = array<i64: 3, 3>}, {transform_indices = @transform_1, window_bounds = array<i64: 3>}, {transform_indices = @transform_2, window_bounds = array<i64: 1, 3, 2, 128>}, {transform_indices = @transform_3, window_bounds = array<i64: 1, 3, 2, 128>}]} {
    %c0 = arith.constant 0 : index
    %c0_0 = arith.constant 0 : index
    %c0_1 = arith.constant 0 : index
    %c0_2 = arith.constant 0 : index
    %0 = vector.load %arg5[%c0, %c0_0, %c0_1, %c0_2] : memref<1x3x2x128xf32, #tpu.memory_space<vmem>>, vector<1x1x2x128xf32>
    %1 = vector.shape_cast %0 : vector<1x1x2x128xf32> to vector<2x128xf32>
    %c0_3 = arith.constant 0 : index
    %c1 = arith.constant 1 : index
    %c0_4 = arith.constant 0 : index
    %c0_5 = arith.constant 0 : index
    %2 = vector.load %arg5[%c0_3, %c1, %c0_4, %c0_5] : memref<1x3x2x128xf32, #tpu.memory_space<vmem>>, vector<1x1x2x128xf32>
    %3 = vector.shape_cast %2 : vector<1x1x2x128xf32> to vector<2x128xf32>
    %c0_6 = arith.constant 0 : index
    %c2 = arith.constant 2 : index
    %c0_7 = arith.constant 0 : index
    %c0_8 = arith.constant 0 : index
    %4 = vector.load %arg5[%c0_6, %c2, %c0_7, %c0_8] : memref<1x3x2x128xf32, #tpu.memory_space<vmem>>, vector<1x1x2x128xf32>
    %5 = vector.shape_cast %4 : vector<1x1x2x128xf32> to vector<2x128xf32>
    %c0_9 = arith.constant 0 : index
    %c0_10 = arith.constant 0 : index
    %6 = memref.load %arg3[%c0_9, %c0_10] : memref<3x3xf32, #tpu.memory_space<smem>>
    %7 = vector.broadcast %6 : f32 to vector<2x128xf32>
    %8 = arith.mulf %7, %1 : vector<2x128xf32>
    %c0_11 = arith.constant 0 : index
    %c1_12 = arith.constant 1 : index
    %9 = memref.load %arg3[%c0_11, %c1_12] : memref<3x3xf32, #tpu.memory_space<smem>>
    %10 = vector.broadcast %9 : f32 to vector<2x128xf32>
    %11 = arith.mulf %10, %3 : vector<2x128xf32>
    %12 = arith.addf %8, %11 : vector<2x128xf32>
    %c0_13 = arith.constant 0 : index
    %c2_14 = arith.constant 2 : index
    %13 = memref.load %arg3[%c0_13, %c2_14] : memref<3x3xf32, #tpu.memory_space<smem>>
    %14 = vector.broadcast %13 : f32 to vector<2x128xf32>
    %15 = arith.mulf %14, %5 : vector<2x128xf32>
    %16 = arith.addf %12, %15 : vector<2x128xf32>
    %c0_15 = arith.constant 0 : index
    %17 = memref.load %arg4[%c0_15] : memref<3xf32, #tpu.memory_space<smem>>
    %18 = vector.broadcast %17 : f32 to vector<2x128xf32>
    %19 = arith.addf %16, %18 : vector<2x128xf32>
    %c0_16 = arith.constant 0 : index
    %c0_17 = arith.constant 0 : index
    %c0_18 = arith.constant 0 : index
    %c0_19 = arith.constant 0 : index
    %20 = vector.load %arg6[%c0_16, %c0_17, %c0_18, %c0_19] : memref<1x3x2x128xf32, #tpu.memory_space<vmem>>, vector<1x1x2x128xf32>
    %21 = vector.shape_cast %20 : vector<1x1x2x128xf32> to vector<2x128xf32>
    %22 = vector.shape_cast %19 : vector<2x128xf32> to vector<1x1x2x128xf32>
    tpu.vector_store %arg6[%c0_16, %c0_17, %c0_18, %c0_19], %22 {strides = array<i32>} : memref<1x3x2x128xf32, #tpu.memory_space<vmem>>, vector<1x1x2x128xf32>,
    %c1_20 = arith.constant 1 : index
    %c0_21 = arith.constant 0 : index
    %23 = memref.load %arg3[%c1_20, %c0_21] : memref<3x3xf32, #tpu.memory_space<smem>>
    %24 = vector.broadcast %23 : f32 to vector<2x128xf32>
    %25 = arith.mulf %24, %1 : vector<2x128xf32>
    %c1_22 = arith.constant 1 : index
    %c1_23 = arith.constant 1 : index
    %26 = memref.load %arg3[%c1_22, %c1_23] : memref<3x3xf32, #tpu.memory_space<smem>>
    %27 = vector.broadcast %26 : f32 to vector<2x128xf32>
    %28 = arith.mulf %27, %3 : vector<2x128xf32>
    %29 = arith.addf %25, %28 : vector<2x128xf32>
    %c1_24 = arith.constant 1 : index
    %c2_25 = arith.constant 2 : index
    %30 = memref.load %arg3[%c1_24, %c2_25] : memref<3x3xf32, #tpu.memory_space<smem>>
    %31 = vector.broadcast %30 : f32 to vector<2x128xf32>
    %32 = arith.mulf %31, %5 : vector<2x128xf32>
    %33 = arith.addf %29, %32 : vector<2x128xf32>
    %c1_26 = arith.constant 1 : index
    %34 = memref.load %arg4[%c1_26] : memref<3xf32, #tpu.memory_space<smem>>
    %35 = vector.broadcast %34 : f32 to vector<2x128xf32>
    %36 = arith.addf %33, %35 : vector<2x128xf32>
    %c0_27 = arith.constant 0 : index
    %c1_28 = arith.constant 1 : index
    %c0_29 = arith.constant 0 : index
    %c0_30 = arith.constant 0 : index
    %37 = vector.load %arg6[%c0_27, %c1_28, %c0_29, %c0_30] : memref<1x3x2x128xf32, #tpu.memory_space<vmem>>, vector<1x1x2x128xf32>
    %38 = vector.shape_cast %37 : vector<1x1x2x128xf32> to vector<2x128xf32>
    %39 = vector.shape_cast %36 : vector<2x128xf32> to vector<1x1x2x128xf32>
    tpu.vector_store %arg6[%c0_27, %c1_28, %c0_29, %c0_30], %39 {strides = array<i32>} : memref<1x3x2x128xf32, #tpu.memory_space<vmem>>, vector<1x1x2x128xf32>,
    %c2_31 = arith.constant 2 : index
    %c0_32 = arith.constant 0 : index
    %40 = memref.load %arg3[%c2_31, %c0_32] : memref<3x3xf32, #tpu.memory_space<smem>>
    %41 = vector.broadcast %40 : f32 to vector<2x128xf32>
    %42 = arith.mulf %41, %1 : vector<2x128xf32>
    %c2_33 = arith.constant 2 : index
    %c1_34 = arith.constant 1 : index
    %43 = memref.load %arg3[%c2_33, %c1_34] : memref<3x3xf32, #tpu.memory_space<smem>>
    %44 = vector.broadcast %43 : f32 to vector<2x128xf32>
    %45 = arith.mulf %44, %3 : vector<2x128xf32>
    %46 = arith.addf %42, %45 : vector<2x128xf32>
    %c2_35 = arith.constant 2 : index
    %c2_36 = arith.constant 2 : index
    %47 = memref.load %arg3[%c2_35, %c2_36] : memref<3x3xf32, #tpu.memory_space<smem>>
    %48 = vector.broadcast %47 : f32 to vector<2x128xf32>
    %49 = arith.mulf %48, %5 : vector<2x128xf32>
    %50 = arith.addf %46, %49 : vector<2x128xf32>
    %c2_37 = arith.constant 2 : index
    %51 = memref.load %arg4[%c2_37] : memref<3xf32, #tpu.memory_space<smem>>
    %52 = vector.broadcast %51 : f32 to vector<2x128xf32>
    %53 = arith.addf %50, %52 : vector<2x128xf32>
    %c0_38 = arith.constant 0 : index
    %c2_39 = arith.constant 2 : index
    %c0_40 = arith.constant 0 : index
    %c0_41 = arith.constant 0 : index
    %54 = vector.load %arg6[%c0_38, %c2_39, %c0_40, %c0_41] : memref<1x3x2x128xf32, #tpu.memory_space<vmem>>, vector<1x1x2x128xf32>
    %55 = vector.shape_cast %54 : vector<1x1x2x128xf32> to vector<2x128xf32>
    %56 = vector.shape_cast %53 : vector<2x128xf32> to vector<1x1x2x128xf32>
    tpu.vector_store %arg6[%c0_38, %c2_39, %c0_40, %c0_41], %56 {strides = array<i32>} : memref<1x3x2x128xf32, #tpu.memory_space<vmem>>, vector<1x1x2x128xf32>,
    return
  }
  func.func @transform_0(%arg0: i32, %arg1: i32, %arg2: i32) -> (i32, i32) {
    %c0_i32 = arith.constant 0 : i32
    %c0_i32_0 = arith.constant 0 : i32
    %c0_i32_1 = arith.constant 0 : i32
    return %c0_i32, %c0_i32_0 : i32, i32
  }
  func.func @transform_1(%arg0: i32, %arg1: i32, %arg2: i32) -> i32 {
    %c0_i32 = arith.constant 0 : i32
    %c0_i32_0 = arith.constant 0 : i32
    return %c0_i32 : i32
  }
  func.func @transform_2(%arg0: i32, %arg1: i32, %arg2: i32) -> (i32, i32, i32, i32) {
    %c0_i32 = arith.constant 0 : i32
    %c0_i32_0 = arith.constant 0 : i32
    return %arg0, %c0_i32, %arg1, %arg2 : i32, i32, i32, i32
  }
  func.func @transform_3(%arg0: i32, %arg1: i32, %arg2: i32) -> (i32, i32, i32, i32) {
    %c0_i32 = arith.constant 0 : i32
    %c0_i32_0 = arith.constant 0 : i32
    return %arg0, %c0_i32, %arg1, %arg2 : i32, i32, i32, i32
  }
}

</mosaic_0001>

<llo_original>
// kernel: tpu_custom_call.1
$region0: #{tpu_custom_call.1}
  #allocation0 [shape = 'u32[]', space=smem, size = 0x4, offset = 0x4, fixed_abs, tag = 'smem constant byte address 0x4 - core index']
  #allocation1 [shape = 'u32[144,128]{1,0:T(1,128)}', space=vmem, size = 0x12000, scoped, tag = 'internal scratch']
  %s0 = inlined_call_operand.hbm [shape: f32[3,3], index: 0, kind: input, shape index: {}]
  %s1 = inlined_call_operand.vmem [shape: f32[3], index: 1, kind: input, shape index: {}]
  %s2 = inlined_call_operand.hbm [shape: f32[2,3,2,128], index: 2, kind: input, shape index: {}]
  %s3 = inlined_call_operand.hbm [shape: f32[2,3,2,128], index: 3, kind: output, shape index: {}]
  %s4 = sld [smem:[#allocation0]]
  $region57: #{tpu_custom_call.1} parent=0
    _
  %s6 = ssub.s32 1, %s4
  %s7 = scalar_select 0, %s6, %s4
  $region1: #{tpu_custom_call.1} parent=0
    #allocation2 [shape = 'u8[2048]{0}', space=smem, size = 0x800, scoped, tag = 'input window, operand 0, single buffered']
    #allocation3 [shape = 's32[2]{0}', space=sflag, size = 0x8, scoped, tag = 'scoped memory for tpu_custom_call.1']
    #allocation4 [shape = 's32[2]{0}', space=sflag, size = 0x8, scoped, tag = 'scoped memory for tpu_custom_call.1']
    #allocation5 [shape = 's32[2]{0}', space=sflag, size = 0x8, scoped, tag = 'scoped memory for tpu_custom_call.1']
    #allocation6 [shape = 's32[2]{0}', space=sflag, size = 0x8, scoped, tag = 'scoped memory for tpu_custom_call.1']
    #allocation7 [shape = 'u8[512]{0}', space=smem, size = 0x200, scoped, tag = 'input window, operand 1, single buffered']
    #allocation8 [shape = 'u8[6144]{0}', space=vmem, size = 0x1800, scoped, tag = 'input window, operand 2']
    #allocation9 [shape = 'u8[6144]{0}', space=vmem, size = 0x1800, scoped, tag = 'output window, operand 0']
    %8 = vsyncpa [#allocation5], 0
    %9 = vsyncpa [#allocation6], 0
    %10 = vsyncpa [#allocation3], 0
    %s11 = scalar_lea.sflag [#allocation3], 1
    %12 = vsyncpa %s11, 0
    %13 = vsyncpa [#allocation4], 0
    %s14 = scalar_lea.sflag [#allocation4], 1
    %15 = vsyncpa %s14, 0
    loop: start=0, step=1, limit=4
    $region2: #{tpu_custom_call.1} parent=1 // loop_pre_header
      _
    $region3: #{tpu_custom_call.1} parent=1 // loop_header
      %s17 = sphi 0, %s21
      %p18 = scmp.ge.s32.totalorder %s17, 4
      %s24 = sphi 0, %s43
      %s25 = sphi 0, %s39
      %s26 = sphi 0, %s35
      %s27 = sphi 0, %s24
      %s28 = sphi 0, %s25
      %s29 = sphi 0, %s26
      %s30 = sphi 0, %s27
      %s31 = sphi 0, %s28
      %s32 = sphi 0, %s29
      %s44 = sphi 0, %s44
      %s46 = sphi 0, %s44
      %s47 = sphi 0, %s46
      %s61 = sphi 0, %s47
      %s65 = sphi 0, %s65
      %s67 = sphi 0, %s65
      %s68 = sphi 0, %s67
      %s82 = sphi 0, %s68
      %s92 = sphi 0, %s94
      %s95 = sphi 0, %s92
      %s96 = sphi 0, %s95
      %s112 = sphi 0, %s96
      %s122 = sphi 0, %s124
      %s125 = sphi 0, %s122
      %s126 = sphi 0, %s125
      %s142 = sphi 0, %s126
    $region4: #{tpu_custom_call.1} parent=1 // loop_header_branch
      %20 = sbr.rel (%p18) target = $region8
    $region5: #{tpu_custom_call.1} parent=1 // loop_body
      %s22 = ssub.s32 %s17, 1
      %s23 = ssub.s32 %s17, 2
      %s33 = sadd.s32 1, %s26
      %p34 = scmp.ge.s32.totalorder %s33, 1
      %s35 = scalar_select %p34, 0, %s33
      %s36 = sadd.s32 1, %s25
      %s37 = scalar_select %p34, %s36, %s25
      %p38 = scmp.ge.s32.totalorder %s37, 1
      %s39 = scalar_select %p38, 0, %s37
      %s40 = sadd.s32 1, %s24
      %s41 = scalar_select %p38, %s40, %s24
      %p42 = scmp.ge.s32.totalorder %s41, 2
      %s43 = scalar_select %p42, 0, %s41
      %s45 = sadd.s32 %s44, 1
      %p48 = scmp.eq.s32.totalorder %s17, 1
      %p49 = scmp.ne.s32.totalorder %s44, %s46
      %p50 = scmp.eq.s32.totalorder %s17, 0
      %p51 = por %p49, %p50
      %p52 = scmp.ne.s32.totalorder %s44, %s46
      %p53 = scmp.eq.s32.totalorder %s22, 1
      %p54 = por %p52, %p53
      %p55 = scmp.ne.s32.totalorder %s46, %s47
      %p56 = scmp.eq.s32.totalorder %s22, 0
      %p57 = por %p55, %p56
      %p58 = scmp.ne.s32.totalorder %s46, %s47
      %p59 = scmp.eq.s32.totalorder %s23, 1
      %p60 = por %p58, %p59
      %p62 = scmp.ne.s32.totalorder %s47, %s61
      %p63 = scmp.eq.s32.totalorder %s23, 0
      %p64 = por %p62, %p63
      %s66 = sadd.s32 %s65, 1
      %p69 = scmp.eq.s32.totalorder %s17, 1
      %p70 = scmp.ne.s32.totalorder %s65, %s67
      %p71 = scmp.eq.s32.totalorder %s17, 0
      %p72 = por %p70, %p71
      %p73 = scmp.ne.s32.totalorder %s65, %s67
      %p74 = scmp.eq.s32.totalorder %s22, 1
      %p75 = por %p73, %p74
      %p76 = scmp.ne.s32.totalorder %s67, %s68
      %p77 = scmp.eq.s32.totalorder %s22, 0
      %p78 = por %p76, %p77
      %p79 = scmp.ne.s32.totalorder %s67, %s68
      %p80 = scmp.eq.s32.totalorder %s23, 1
      %p81 = por %p79, %p80
      %p83 = scmp.ne.s32.totalorder %s68, %s82
      %p84 = scmp.eq.s32.totalorder %s23, 0
      %p85 = por %p83, %p84
      %s86 = ssub.s32 %s24, %s43
      %s87 = ssub.s32 %s25, %s39
      %s88 = sor.u32 %s86, %s87
      %s89 = ssub.s32 %s26, %s35
      %s90 = sor.u32 %s88, %s89
      %p91 = scmp.eq.s32.totalorder %s90, 0
      %s93 = sadd.s32 %s92, 1
      %s94 = scalar_select %p91, %s92, %s93
      %p97 = pneg %p91
      %p98 = scmp.eq.s32.totalorder %s17, 1
      %p99 = por %p97, %p98
      %p100 = scmp.ne.s32.totalorder %s92, %s95
      %p101 = scmp.eq.s32.totalorder %s17, 0
      %p102 = por %p100, %p101
      %p103 = scmp.ne.s32.totalorder %s92, %s95
      %p104 = scmp.eq.s32.totalorder %s22, 1
      %p105 = por %p103, %p104
      %p106 = scmp.ne.s32.totalorder %s95, %s96
      %p107 = scmp.eq.s32.totalorder %s22, 0
      %p108 = por %p106, %p107
      %p109 = scmp.ne.s32.totalorder %s95, %s96
      %p110 = scmp.eq.s32.totalorder %s23, 1
      %p111 = por %p109, %p110
      %p113 = scmp.ne.s32.totalorder %s96, %s112
      %p114 = scmp.eq.s32.totalorder %s23, 0
      %p115 = por %p113, %p114
      %s116 = ssub.s32 %s24, %s43
      %s117 = ssub.s32 %s25, %s39
      %s118 = sor.u32 %s116, %s117
      %s119 = ssub.s32 %s26, %s35
      %s120 = sor.u32 %s118, %s119
      %p121 = scmp.eq.s32.totalorder %s120, 0
      %s123 = sadd.s32 %s122, 1
      %s124 = scalar_select %p121, %s122, %s123
      %p127 = pneg %p121
      %p128 = scmp.eq.s32.totalorder %s17, 1
      %p129 = por %p127, %p128
      %p130 = scmp.ne.s32.totalorder %s122, %s125
      %p131 = scmp.eq.s32.totalorder %s17, 0
      %p132 = por %p130, %p131
      %p133 = scmp.ne.s32.totalorder %s122, %s125
      %p134 = scmp.eq.s32.totalorder %s22, 1
      %p135 = por %p133, %p134
      %p136 = scmp.ne.s32.totalorder %s125, %s126
      %p137 = scmp.eq.s32.totalorder %s22, 0
      %p138 = por %p136, %p137
      %p139 = scmp.ne.s32.totalorder %s125, %s126
      %p140 = scmp.eq.s32.totalorder %s23, 1
      %p141 = por %p139, %p140
      %p143 = scmp.ne.s32.totalorder %s126, %s142
      %p144 = scmp.eq.s32.totalorder %s23, 0
      %p145 = por %p143, %p144
      %p146 = scmp.le.s32.totalorder 1, %s17
      %p147 = scmp.lt.s32.totalorder %s17, 3
      %p148 = pnand %p146, %p147
      %p149 = pneg %p148
      // Predicated region
      $region9: #{tpu_custom_call.1} parent=5 // pred_check
        _
      $region10: #{tpu_custom_call.1} parent=5 // pred_check_branch
        %151 = sbr.rel (%p148) target = $region12
      $region11: #{tpu_custom_call.1} parent=5 // pred_region
        %s152 = ssub.s32 %s17, 1
        // Predicated region
        $region13: #{tpu_custom_call.1} parent=11 // pred_check
          %p153 = pneg %p57
        $region14: #{tpu_custom_call.1} parent=11 // pred_check_branch
          %155 = sbr.rel (%p153) target = $region16
        $region15: #{tpu_custom_call.1} parent=11 // pred_region
          %s157 = ssub.s32 64, 64
          %158 = vsyncadd [#allocation5], %s157
          %161 = dma.hbm_to_smem %s0, 64, [#allocation2], [#allocation5]
        $region16: #{tpu_custom_call.1} parent=11 // pred_fallthru
          _
        // Predicated region
        $region17: #{tpu_custom_call.1} parent=11 // pred_check
          %p162 = pneg %p78
        $region18: #{tpu_custom_call.1} parent=11 // pred_check_branch
          %164 = sbr.rel (%p162) target = $region20
        $region19: #{tpu_custom_call.1} parent=11 // pred_region
          %s166 = ssub.s32 16, 16
          %167 = vsyncadd [#allocation6], %s166
          %s169 = sshll.u32 %s1, 4
          %s170 = int_to_ptr.vmem [resolvable:$true] %s169
          %172 = dma.vmem_to_smem %s170, 16, [#allocation7], [#allocation6]
        $region20: #{tpu_custom_call.1} parent=11 // pred_fallthru
          _
      $region12: #{tpu_custom_call.1} parent=5 // pred_fallthru
        _
      %p173 = scmp.lt.s32.totalorder %s17, 2
      // Predicated region
      $region21: #{tpu_custom_call.1} parent=5 // pred_check
        %p174 = pneg %p173
      $region22: #{tpu_custom_call.1} parent=5 // pred_check_branch
        %176 = sbr.rel (%p174) target = $region24
      $region23: #{tpu_custom_call.1} parent=5 // pred_region
        // Predicated region
        $region25: #{tpu_custom_call.1} parent=23 // pred_check
          %p177 = pneg %p102
        $region26: #{tpu_custom_call.1} parent=23 // pred_check_branch
          %179 = sbr.rel (%p177) target = $region28
        $region27: #{tpu_custom_call.1} parent=23 // pred_region
          %s180 = sand.u32 %s92, 1
          %s181 = scalar_lea.sflag [#allocation3], %s180
          %s182 = sand.u32 %s92, 1
          %s183 = smul.addr %s182, 6
          %s184 = scalar_lea.vmem [#allocation8], %s183
          %s186 = ssub.s32 96, 96
          %187 = vsyncadd %s181, %s186
          %s188 = sadd.s32 %s26, %s25
          %s189 = smul.addr %s24, 3
          %s190 = sadd.s32 %s188, %s189
          %s191 = smul.addr %s190, 32
          %s192 = scalar_lea.hbm %s2, %s191
          %s193 = sshll.u32 %s184, 4
          %s194 = int_to_ptr.vmem [resolvable:$true] %s193
          %199 = dma.hbm_to_vmem [thread:$0]  %s192, 96, %s194, %s181, 32, 32, 2
        $region28: #{tpu_custom_call.1} parent=23 // pred_fallthru
          _
      $region24: #{tpu_custom_call.1} parent=5 // pred_fallthru
        _
      %p200 = scmp.le.s32.totalorder 1, %s17
      %p201 = scmp.lt.s32.totalorder %s17, 3
      %p202 = pnand %p200, %p201
      %p203 = pneg %p202
      // Predicated region
      $region29: #{tpu_custom_call.1} parent=5 // pred_check
        _
      $region30: #{tpu_custom_call.1} parent=5 // pred_check_branch
        %205 = sbr.rel (%p202) target = $region32
      $region31: #{tpu_custom_call.1} parent=5 // pred_region
        %s206 = ssub.s32 %s17, 1
        // Predicated region
        $region33: #{tpu_custom_call.1} parent=31 // pred_check
          %p207 = pneg %p57
        $region34: #{tpu_custom_call.1} parent=31 // pred_check_branch
          %209 = sbr.rel (%p207) target = $region36
        $region35: #{tpu_custom_call.1} parent=31 // pred_region
          %210 = dma.done [#allocation5], 64
        $region36: #{tpu_custom_call.1} parent=31 // pred_fallthru
          _
        // Predicated region
        $region37: #{tpu_custom_call.1} parent=31 // pred_check
          %p211 = pneg %p78
        $region38: #{tpu_custom_call.1} parent=31 // pred_check_branch
          %213 = sbr.rel (%p211) target = $region40
        $region39: #{tpu_custom_call.1} parent=31 // pred_region
          %214 = dma.done [#allocation6], 16
        $region40: #{tpu_custom_call.1} parent=31 // pred_fallthru
          _
        %s215 = sand.u32 %s95, 1
        %s216 = scalar_lea.sflag [#allocation3], %s215
        %s217 = sand.u32 %s95, 1
        %s218 = smul.addr %s217, 6
        %s219 = scalar_lea.vmem [#allocation8], %s218
        // Predicated region
        $region41: #{tpu_custom_call.1} parent=31 // pred_check
          %p220 = pneg %p108
        $region42: #{tpu_custom_call.1} parent=31 // pred_check_branch
          %222 = sbr.rel (%p220) target = $region44
        $region43: #{tpu_custom_call.1} parent=31 // pred_region
          %223 = dma.done %s216, 96
        $region44: #{tpu_custom_call.1} parent=31 // pred_fallthru
          _
        %224 = sfence
        %p225 = pneg %p57
        %p226 = pneg %p54
        %p227 = pneg %p78
        %p228 = pneg %p75
        %s229 = sand.u32 %s95, 1
        %s230 = scalar_lea.sflag [#allocation3], %s229
        %s231 = sand.u32 %s95, 1
        %s232 = smul.addr %s231, 6
        %s233 = scalar_lea.vmem [#allocation8], %s232
        %p234 = pneg %p108
        %p235 = pneg %p105
        %p236 = pneg %p138
        %p237 = pneg %p135
        %s238 = sand.u32 %s125, 1
        %s239 = scalar_lea.sflag [#allocation4], %s238
        %s240 = sand.u32 %s125, 1
        %s241 = smul.addr %s240, 6
        %s242 = scalar_lea.vmem [#allocation9], %s241
        %v243 = vld [vmem:[%s219] sm:$0x3]
        %s244 = scalar_lea.vmem %s219, 2 [#allocation8]
        %v245 = vld [vmem:[%s244] sm:$0x3]
        %s246 = scalar_lea.vmem %s219, 4 [#allocation8]
        %v247 = vld [vmem:[%s246] sm:$0x3]
        %s248 = sld [smem:[#allocation2]]
        %v249 = vstv %s248
        %v250 = vmul.f32 %v249, %v243
        %s251 = sld [smem:[#allocation2 + $0x1]]
        %v252 = vstv %s251
        %v253 = vmul.f32 %v252, %v245
        %v254 = vadd.f32 %v250, %v253
        %s255 = sld [smem:[#allocation2 + $0x2]]
        %v256 = vstv %s255
        %v257 = vmul.f32 %v256, %v247
        %v258 = vadd.f32 %v254, %v257
        %s259 = sld [smem:[#allocation7]]
        %v260 = vstv %s259
        %v261 = vadd.f32 %v258, %v260
        %262 = vst [vmem:[%s242] sm:$0x3] %v261
        %s263 = sld [smem:[#allocation2 + $0x80]]
        %v264 = vstv %s263
        %v265 = vmul.f32 %v264, %v243
        %s266 = sld [smem:[#allocation2 + $0x81]]
        %v267 = vstv %s266
        %v268 = vmul.f32 %v267, %v245
        %v269 = vadd.f32 %v265, %v268
        %s270 = sld [smem:[#allocation2 + $0x82]]
        %v271 = vstv %s270
        %v272 = vmul.f32 %v271, %v247
        %v273 = vadd.f32 %v269, %v272
        %s274 = sld [smem:[#allocation7 + $0x1]]
        %v275 = vstv %s274
        %v276 = vadd.f32 %v273, %v275
        %s277 = scalar_lea.vmem %s242, 2 [#allocation9]
        %278 = vst [vmem:[%s277] sm:$0x3] %v276
        %s279 = sld [smem:[#allocation2 + $0x100]]
        %v280 = vstv %s279
        %v281 = vmul.f32 %v280, %v243
        %s282 = sld [smem:[#allocation2 + $0x101]]
        %v283 = vstv %s282
        %v284 = vmul.f32 %v283, %v245
        %v285 = vadd.f32 %v281, %v284
        %s286 = sld [smem:[#allocation2 + $0x102]]
        %v287 = vstv %s286
        %v288 = vmul.f32 %v287, %v247
        %v289 = vadd.f32 %v285, %v288
        %s290 = sld [smem:[#allocation7 + $0x2]]
        %v291 = vstv %s290
        %v292 = vadd.f32 %v289, %v291
        %s293 = scalar_lea.vmem %s242, 4 [#allocation9]
        %294 = vst [vmem:[%s293] sm:$0x3] %v292
        %s295 = sand.u32 %s125, 1
        %s296 = scalar_lea.sflag [#allocation4], %s295
        %s297 = sand.u32 %s125, 1
        %s298 = smul.addr %s297, 6
        %s299 = scalar_lea.vmem [#allocation9], %s298
        // Predicated region
        $region45: #{tpu_custom_call.1} parent=31 // pred_check
          %p300 = pneg %p135
        $region46: #{tpu_custom_call.1} parent=31 // pred_check_branch
          %302 = sbr.rel (%p300) target = $region48
        $region47: #{tpu_custom_call.1} parent=31 // pred_region
          %s304 = ssub.s32 96, 96
          %305 = vsyncadd %s296, %s304
          %s306 = sadd.s32 %s29, %s28
          %s307 = smul.addr %s27, 3
          %s308 = sadd.s32 %s306, %s307
          %s309 = smul.addr %s308, 32
          %s310 = scalar_lea.hbm %s3, %s309
          %s311 = sshll.u32 %s299, 4
          %s312 = int_to_ptr.vmem [resolvable:$true] %s311
          %317 = dma.vmem_to_hbm [thread:$0]  %s312, 96, %s310, %s296, 32, 32, 2
        $region48: #{tpu_custom_call.1} parent=31 // pred_fallthru
          _
      $region32: #{tpu_custom_call.1} parent=5 // pred_fallthru
        _
      %p318 = scmp.le.s32.totalorder 2, %s17
      // Predicated region
      $region49: #{tpu_custom_call.1} parent=5 // pred_check
        %p319 = pneg %p318
      $region50: #{tpu_custom_call.1} parent=5 // pred_check_branch
        %321 = sbr.rel (%p319) target = $region52
      $region51: #{tpu_custom_call.1} parent=5 // pred_region
        %s322 = ssub.s32 %s17, 2
        // Predicated region
        $region53: #{tpu_custom_call.1} parent=51 // pred_check
          %p323 = pneg %p141
        $region54: #{tpu_custom_call.1} parent=51 // pred_check_branch
          %325 = sbr.rel (%p323) target = $region56
        $region55: #{tpu_custom_call.1} parent=51 // pred_region
          %s326 = sand.u32 %s126, 1
          %s327 = scalar_lea.sflag [#allocation4], %s326
          %s328 = sand.u32 %s126, 1
          %s329 = smul.addr %s328, 6
          %s330 = scalar_lea.vmem [#allocation9], %s329
          %331 = dma.done %s327, 96
        $region56: #{tpu_custom_call.1} parent=51 // pred_fallthru
          _
      $region52: #{tpu_custom_call.1} parent=5 // pred_fallthru
        _
    $region6: #{tpu_custom_call.1} parent=1 // loop_footer
      %s21 = sadd.s32 1, %s17
    $region7: #{tpu_custom_call.1} parent=1 // loop_footer_branch
      %16 = sbr.rel target = $region3
    $region8: #{tpu_custom_call.1} parent=1 // loop_exit
      _
    %332 = vsyncpa [#allocation3], 1
    %s333 = scalar_lea.sflag [#allocation3], 1
    %334 = vsyncpa %s333, 1
    %335 = vsyncpa [#allocation4], 1
    %s336 = scalar_lea.sflag [#allocation4], 1
    %337 = vsyncpa %s336, 1
    %338 = vsyncpa [#allocation5], 1
    %s339 = scalar_lea.sflag [#allocation5], 1
    %340 = vsyncpa %s339, 1
    %341 = vsyncpa [#allocation6], 1
    %s342 = scalar_lea.sflag [#allocation6], 1
    %343 = vsyncpa %s342, 1

</llo_original>
